<compile_context>
chip_gen: v7x
topology: tpu7x:2x2x1
jax: 0.10.0
libtpu: 0.0.40
codegen_flags: <defaults>
</compile_context>

<pallas_src>
import functools

import jax
import jax.numpy as jnp
from jax.experimental import pallas as pl
from jax.experimental.pallas import tpu as pltpu

PATCH_DIM = 512      # PatchClassifier.patch_dim
NUM_CLASSES = 4      # config_params['numclasses'] for this synthetic run
LANE = 128           # TPU vreg lane width
SUBLANE = 8          # f32 sublane width


def _round_up(x, m):
    return ((x + m - 1) // m) * m


def _linear_kernel(x_ref, w_ref, b_ref, o_ref):
    # x_ref: (tm, 512), w_ref: (512, C_pad), b_ref: (1, C_pad), o_ref: (tm, C_pad)
    acc = jnp.dot(x_ref[...], w_ref[...], preferred_element_type=jnp.float32)
    o_ref[...] = (acc + b_ref[...]).astype(o_ref.dtype)


def prepare_patch_classifier_params(weight, bias):
    """One-time (init-time) lane padding of the classifier parameters.

    weight: (512, numclasses) -- transpose of PyTorch's (out, in) layout.
    bias:   (numclasses,)
    Returns (w_padded, b_padded) with the class dim zero-padded to 128 lanes.
    """
    assert weight.shape[0] == PATCH_DIM
    C = weight.shape[1]
    C_pad = _round_up(C, LANE)
    w_p = jnp.zeros((PATCH_DIM, C_pad), weight.dtype).at[:, :C].set(weight)
    b_p = jnp.zeros((1, C_pad), jnp.float32).at[0, :C].set(bias.astype(jnp.float32))
    return w_p, b_p


@functools.partial(jax.jit, static_argnames=("num_classes", "tm_target"))
def patch_classifier_forward(x, w_padded, b_padded, *, num_classes, tm_target=2048):
    """x: (..., 512) -> (..., num_classes); matches nn.Linear(512, C) semantics."""
    orig_shape = x.shape
    assert orig_shape[-1] == PATCH_DIM
    C_pad = w_padded.shape[1]

    x2d = x.reshape(-1, PATCH_DIM)
    M = x2d.shape[0]

    # Row tiling: aim for >=2 grid steps so the 'parallel' row axis can shard
    # across both TensorCores on v7x (harmless on single-TC v5e/v6e), capped at
    # tm_target.  tm stays a multiple of 8 so the BlockSpec is (8,128)-legal;
    # ragged M is handled by Pallas' partial final block (no jnp.pad copy).
    M_aligned = _round_up(max(M, 1), SUBLANE)
    tm = min(tm_target, max(SUBLANE, _round_up(pl.cdiv(M_aligned, 2), SUBLANE)))
    grid = (pl.cdiv(M, tm),)

    out_dtype = x.dtype
    cost = pl.CostEstimate(
        flops=2 * M * PATCH_DIM * C_pad,
        transcendentals=0,
        bytes_accessed=(M * PATCH_DIM * x2d.dtype.itemsize
                        + M * C_pad * jnp.dtype(out_dtype).itemsize
                        + PATCH_DIM * C_pad * w_padded.dtype.itemsize
                        + C_pad * 4),
    )

    out = pl.pallas_call(
        _linear_kernel,
        out_shape=jax.ShapeDtypeStruct((M, C_pad), out_dtype),
        grid_spec=pltpu.PrefetchScalarGridSpec(
            num_scalar_prefetch=0,
            grid=grid,
            in_specs=[
                # x tile streams along rows.
                pl.BlockSpec((tm, PATCH_DIM), lambda i: (i, 0)),
                # Weight / bias: constant index_map -> stays resident in VMEM.
                pl.BlockSpec((PATCH_DIM, C_pad), lambda i: (0, 0)),
                pl.BlockSpec((1, C_pad), lambda i: (0, 0)),
            ],
            out_specs=pl.BlockSpec((tm, C_pad), lambda i: (i, 0)),
        ),
        compiler_params=pltpu.CompilerParams(
            dimension_semantics=("parallel",),
            vmem_limit_bytes=32 * 1024 * 1024,
        ),
        cost_estimate=cost,
    )(x2d, w_padded, b_padded)

    # Strip class-lane padding; under jit this slice/reshape fuses with the
    # consumer instead of a separate full-buffer pass.
    out = out[:, :num_classes]
    return out.reshape(*orig_shape[:-1], num_classes)


if __name__ == "__main__":
    key = jax.random.PRNGKey(0)
    kx, kw, kb = jax.random.split(key, 3)

    # Small input consistent with the module: a batch of patch feature vectors.
    batch, n_patches = 2, 8
    x = jax.random.normal(kx, (batch, n_patches, PATCH_DIM), dtype=jnp.float32)

    # Deterministic synthetic parameter init (PyTorch keeps (out, in); we
    # store the transpose so the kernel is a plain x @ W + b).
    bound = 1.0 / jnp.sqrt(PATCH_DIM)
    weight = jax.random.uniform(
        kw, (PATCH_DIM, NUM_CLASSES), minval=-bound, maxval=bound,
        dtype=jnp.float32)
    bias = jax.random.uniform(
        kb, (NUM_CLASSES,), minval=-bound, maxval=bound, dtype=jnp.float32)

    # Lane-pad the parameters ONCE at init (not per call).
    w_padded, b_padded = prepare_patch_classifier_params(weight, bias)

    out = patch_classifier_forward(x, w_padded, b_padded, num_classes=NUM_CLASSES)
    jax.block_until_ready(out)

    # Cross-check against plain JAX reference.
    ref = x @ weight + bias
    assert out.shape == (batch, n_patches, NUM_CLASSES)
    assert jnp.allclose(out, ref, atol=1e-5, rtol=1e-5)

    # Exercise the large / ragged-M path (multiple grid steps + partial final
    # block handled by Pallas, no wrapper-side padding copy).
    big_M = 2048 + 40   # not a multiple of the row tile
    xb = jax.random.normal(jax.random.PRNGKey(1), (big_M, PATCH_DIM), jnp.float32)
    ob = patch_classifier_forward(xb, w_padded, b_padded, num_classes=NUM_CLASSES)
    jax.block_until_ready(ob)
    refb = xb @ weight + bias
    assert ob.shape == (big_M, NUM_CLASSES)
    assert jnp.allclose(ob, refb, atol=1e-5, rtol=1e-5)

    print("KERNEL_OK")
</pallas_src>

<mosaic_0001>
module attributes {stable_mosaic.version = 11 : i64} {
  func.func @_linear_kernel(%arg0: i32, %arg1: memref<8x512xf32, #tpu.memory_space<vmem>>, %arg2: memref<512x128xf32, #tpu.memory_space<vmem>>, %arg3: memref<1x128xf32, #tpu.memory_space<vmem>>, %arg4: memref<8x128xf32, #tpu.memory_space<vmem>>) attributes {dimension_semantics = [#tpu.dimension_semantics<parallel>], iteration_bounds = array<i64: 2>, scalar_prefetch = 0 : i64, scratch_operands = 0 : i64, tpu.core_type = #tpu.core_type<tc>, window_params = [{transform_indices = @transform_0, window_bounds = array<i64: 8, 512>}, {pipeline_mode = #tpu.pipeline_mode<synchronous>, transform_indices = @transform_1, window_bounds = array<i64: 512, 128>}, {pipeline_mode = #tpu.pipeline_mode<synchronous>, transform_indices = @transform_2, window_bounds = array<i64: 1, 128>}, {transform_indices = @transform_3, window_bounds = array<i64: 8, 128>}]} {
    %c0 = arith.constant 0 : index
    %c0_0 = arith.constant 0 : index
    %0 = vector.load %arg1[%c0, %c0_0] : memref<8x512xf32, #tpu.memory_space<vmem>>, vector<8x512xf32>
    %c0_1 = arith.constant 0 : index
    %c0_2 = arith.constant 0 : index
    %1 = vector.load %arg2[%c0_1, %c0_2] : memref<512x128xf32, #tpu.memory_space<vmem>>, vector<512x128xf32>
    %cst = arith.constant dense<0.000000e+00> : vector<8x128xf32>
    %2 = tpu.matmul %0, %1, %cst {dimension_numbers = #tpu.dot_dimension_numbers<[1], [0], [0], [1], [0, 0, 1, 1], [], []>} : vector<8x512xf32>, vector<512x128xf32>, vector<8x128xf32> -> vector<8x128xf32>
    %c0_3 = arith.constant 0 : index
    %c0_4 = arith.constant 0 : index
    %3 = vector.load %arg3[%c0_3, %c0_4] : memref<1x128xf32, #tpu.memory_space<vmem>>, vector<1x128xf32>
    %4 = vector.broadcast %3 : vector<1x128xf32> to vector<8x128xf32>
    %5 = arith.addf %2, %4 : vector<8x128xf32>
    %c0_5 = arith.constant 0 : index
    %c0_6 = arith.constant 0 : index
    %6 = vector.load %arg4[%c0_5, %c0_6] : memref<8x128xf32, #tpu.memory_space<vmem>>, vector<8x128xf32>
    tpu.vector_store %arg4[%c0_5, %c0_6], %5 {strides = array<i32>} : memref<8x128xf32, #tpu.memory_space<vmem>>, vector<8x128xf32>,
    return
  }
  func.func @transform_0(%arg0: i32) -> (i32, i32) {
    %c0_i32 = arith.constant 0 : i32
    %c0_i32_0 = arith.constant 0 : i32
    return %arg0, %c0_i32 : i32, i32
  }
  func.func @transform_1(%arg0: i32) -> (i32, i32) {
    %c0_i32 = arith.constant 0 : i32
    %c0_i32_0 = arith.constant 0 : i32
    %c0_i32_1 = arith.constant 0 : i32
    return %c0_i32, %c0_i32_0 : i32, i32
  }
  func.func @transform_2(%arg0: i32) -> (i32, i32) {
    %c0_i32 = arith.constant 0 : i32
    %c0_i32_0 = arith.constant 0 : i32
    %c0_i32_1 = arith.constant 0 : i32
    return %c0_i32, %c0_i32_0 : i32, i32
  }
  func.func @transform_3(%arg0: i32) -> (i32, i32) {
    %c0_i32 = arith.constant 0 : i32
    %c0_i32_0 = arith.constant 0 : i32
    return %arg0, %c0_i32 : i32, i32
  }
}

</mosaic_0001>

<llo_original>
// kernel: patch_classifier_forward.1
$region0: #{patch_classifier_forward.1}
  #allocation0 [shape = 'u32[]', space=smem, size = 0x4, offset = 0x4, fixed_abs, tag = 'smem constant byte address 0x4 - core index']
  #allocation1 [shape = 'u32[144,128]{1,0:T(1,128)}', space=vmem, size = 0x12000, scoped, tag = 'internal scratch']
  %s0 = inlined_call_operand.hbm [shape: f32[16,512], index: 0, kind: input, shape index: {}]
  %s1 = inlined_call_operand.hbm [shape: f32[512,128], index: 1, kind: input, shape index: {}]
  %s2 = inlined_call_operand.vmem [shape: f32[1,128], index: 2, kind: input, shape index: {}]
  %s3 = inlined_call_operand.vmem [shape: f32[16,128], index: 3, kind: output, shape index: {}]
  %s4 = sld [smem:[#allocation0]]
  $region53: #{patch_classifier_forward.1} parent=0
    _
  %s6 = ssub.s32 1, %s4
  %s7 = scalar_select 0, %s6, %s4
  $region1: #{patch_classifier_forward.1} parent=0
    #allocation2 [shape = 'u8[32768]{0}', space=vmem, size = 0x8000, scoped, tag = 'input window, operand 0']
    #allocation3 [shape = 's32[2]{0}', space=sflag, size = 0x8, scoped, tag = 'scoped memory for patch_classifier_forward.1']
    #allocation4 [shape = 'u8[262144]{0}', space=vmem, size = 0x40000, scoped, tag = 'input window, operand 1, single buffered']
    #allocation5 [shape = 's32[1]{0}', space=sflag, size = 0x4, scoped, tag = 'scoped memory for patch_classifier_forward.1']
    %8 = vsyncpa [#allocation3], 0
    %s9 = scalar_lea.sflag [#allocation3], 1
    %10 = vsyncpa %s9, 0
    %11 = vsyncpa [#allocation5], 0
    loop: start=0, step=1, limit=4
    $region2: #{patch_classifier_forward.1} parent=1 // loop_pre_header
      _
    $region3: #{patch_classifier_forward.1} parent=1 // loop_header
      %s13 = sphi 0, %s17
      %p14 = scmp.ge.s32.totalorder %s13, 4
      %s23 = sphi 0, %s25
      %s26 = sphi 0, %s23
      %s27 = sphi 0, %s26
      %s43 = sphi 0, %s27
      %s47 = sphi 0, %s47
      %s49 = sphi 0, %s47
      %s50 = sphi 0, %s49
      %s64 = sphi 0, %s50
      %s68 = sphi 0, %s68
      %s70 = sphi 0, %s68
      %s71 = sphi 0, %s70
      %s85 = sphi 0, %s71
      %s91 = sphi 0, %s93
      %s94 = sphi 0, %s91
      %s95 = sphi 0, %s94
      %s111 = sphi 0, %s95
    $region4: #{patch_classifier_forward.1} parent=1 // loop_header_branch
      %16 = sbr.rel (%p14) target = $region8
    $region5: #{patch_classifier_forward.1} parent=1 // loop_body
      %s18 = ssub.s32 %s13, 1
      %s19 = ssub.s32 %s13, 2
      %s20 = sadd.s32 %s13, 1
      %s21 = ssub.s32 %s13, %s20
      %p22 = scmp.eq.s32.totalorder %s21, 0
      %s24 = sadd.s32 %s23, 1
      %s25 = scalar_select %p22, %s23, %s24
      %p28 = pneg %p22
      %p29 = scmp.eq.s32.totalorder %s13, 1
      %p30 = por %p28, %p29
      %p31 = scmp.ne.s32.totalorder %s23, %s26
      %p32 = scmp.eq.s32.totalorder %s13, 0
      %p33 = por %p31, %p32
      %p34 = scmp.ne.s32.totalorder %s23, %s26
      %p35 = scmp.eq.s32.totalorder %s18, 1
      %p36 = por %p34, %p35
      %p37 = scmp.ne.s32.totalorder %s26, %s27
      %p38 = scmp.eq.s32.totalorder %s18, 0
      %p39 = por %p37, %p38
      %p40 = scmp.ne.s32.totalorder %s26, %s27
      %p41 = scmp.eq.s32.totalorder %s19, 1
      %p42 = por %p40, %p41
      %p44 = scmp.ne.s32.totalorder %s27, %s43
      %p45 = scmp.eq.s32.totalorder %s19, 0
      %p46 = por %p44, %p45
      %s48 = sadd.s32 %s47, 1
      %p51 = scmp.eq.s32.totalorder %s13, 1
      %p52 = scmp.ne.s32.totalorder %s47, %s49
      %p53 = scmp.eq.s32.totalorder %s13, 0
      %p54 = por %p52, %p53
      %p55 = scmp.ne.s32.totalorder %s47, %s49
      %p56 = scmp.eq.s32.totalorder %s18, 1
      %p57 = por %p55, %p56
      %p58 = scmp.ne.s32.totalorder %s49, %s50
      %p59 = scmp.eq.s32.totalorder %s18, 0
      %p60 = por %p58, %p59
      %p61 = scmp.ne.s32.totalorder %s49, %s50
      %p62 = scmp.eq.s32.totalorder %s19, 1
      %p63 = por %p61, %p62
      %p65 = scmp.ne.s32.totalorder %s50, %s64
      %p66 = scmp.eq.s32.totalorder %s19, 0
      %p67 = por %p65, %p66
      %s69 = sadd.s32 %s68, 1
      %p72 = scmp.eq.s32.totalorder %s13, 1
      %p73 = scmp.ne.s32.totalorder %s68, %s70
      %p74 = scmp.eq.s32.totalorder %s13, 0
      %p75 = por %p73, %p74
      %p76 = scmp.ne.s32.totalorder %s68, %s70
      %p77 = scmp.eq.s32.totalorder %s18, 1
      %p78 = por %p76, %p77
      %p79 = scmp.ne.s32.totalorder %s70, %s71
      %p80 = scmp.eq.s32.totalorder %s18, 0
      %p81 = por %p79, %p80
      %p82 = scmp.ne.s32.totalorder %s70, %s71
      %p83 = scmp.eq.s32.totalorder %s19, 1
      %p84 = por %p82, %p83
      %p86 = scmp.ne.s32.totalorder %s71, %s85
      %p87 = scmp.eq.s32.totalorder %s19, 0
      %p88 = por %p86, %p87
      %s89 = ssub.s32 %s13, %s20
      %p90 = scmp.eq.s32.totalorder %s89, 0
      %s92 = sadd.s32 %s91, 1
      %s93 = scalar_select %p90, %s91, %s92
      %p96 = pneg %p90
      %p97 = scmp.eq.s32.totalorder %s13, 1
      %p98 = por %p96, %p97
      %p99 = scmp.ne.s32.totalorder %s91, %s94
      %p100 = scmp.eq.s32.totalorder %s13, 0
      %p101 = por %p99, %p100
      %p102 = scmp.ne.s32.totalorder %s91, %s94
      %p103 = scmp.eq.s32.totalorder %s18, 1
      %p104 = por %p102, %p103
      %p105 = scmp.ne.s32.totalorder %s94, %s95
      %p106 = scmp.eq.s32.totalorder %s18, 0
      %p107 = por %p105, %p106
      %p108 = scmp.ne.s32.totalorder %s94, %s95
      %p109 = scmp.eq.s32.totalorder %s19, 1
      %p110 = por %p108, %p109
      %p112 = scmp.ne.s32.totalorder %s95, %s111
      %p113 = scmp.eq.s32.totalorder %s19, 0
      %p114 = por %p112, %p113
      %p115 = scmp.le.s32.totalorder 1, %s13
      %p116 = scmp.lt.s32.totalorder %s13, 3
      %p117 = pnand %p115, %p116
      %p118 = pneg %p117
      // Predicated region
      $region9: #{patch_classifier_forward.1} parent=5 // pred_check
        _
      $region10: #{patch_classifier_forward.1} parent=5 // pred_check_branch
        %120 = sbr.rel (%p117) target = $region12
      $region11: #{patch_classifier_forward.1} parent=5 // pred_region
        %s121 = ssub.s32 %s13, 1
        // Predicated region
        $region13: #{patch_classifier_forward.1} parent=11 // pred_check
          %p122 = pneg %p60
        $region14: #{patch_classifier_forward.1} parent=11 // pred_check_branch
          %124 = sbr.rel (%p122) target = $region16
        $region15: #{patch_classifier_forward.1} parent=11 // pred_region
          %s126 = ssub.s32 8192, 8192
          %127 = vsyncadd [#allocation5], %s126
          %s128 = sshll.u32 [#allocation4], 4
          %s129 = int_to_ptr.vmem [resolvable:$true] %s128
          %134 = dma.hbm_to_vmem [thread:$0]  %s1, 8192, %s129, [#allocation5], 128, 128, 8
        $region16: #{patch_classifier_forward.1} parent=11 // pred_fallthru
          _
        // Predicated region
        $region17: #{patch_classifier_forward.1} parent=11 // pred_check
          %p135 = pneg %p81
        $region18: #{patch_classifier_forward.1} parent=11 // pred_check_branch
          %137 = sbr.rel (%p135) target = $region20
        $region19: #{patch_classifier_forward.1} parent=11 // pred_region
          _
        $region20: #{patch_classifier_forward.1} parent=11 // pred_fallthru
          _
      $region12: #{patch_classifier_forward.1} parent=5 // pred_fallthru
        _
      %p138 = scmp.lt.s32.totalorder %s13, 2
      // Predicated region
      $region21: #{patch_classifier_forward.1} parent=5 // pred_check
        %p139 = pneg %p138
      $region22: #{patch_classifier_forward.1} parent=5 // pred_check_branch
        %141 = sbr.rel (%p139) target = $region24
      $region23: #{patch_classifier_forward.1} parent=5 // pred_region
        // Predicated region
        $region25: #{patch_classifier_forward.1} parent=23 // pred_check
          %p142 = pneg %p33
        $region26: #{patch_classifier_forward.1} parent=23 // pred_check_branch
          %144 = sbr.rel (%p142) target = $region28
        $region27: #{patch_classifier_forward.1} parent=23 // pred_region
          %s145 = sand.u32 %s23, 1
          %s146 = scalar_lea.sflag [#allocation3], %s145
          %s147 = sand.u32 %s23, 1
          %s148 = smul.addr %s147, 32
          %s149 = scalar_lea.vmem [#allocation2], %s148
          %s151 = ssub.s32 512, 512
          %152 = vsyncadd %s146, %s151
          %s153 = smul.addr %s13, 4
          %s154 = smul.addr %s153, 128
          %s155 = scalar_lea.hbm %s0, %s154
          %s157 = sshll.u32 %s149, 4
          %s158 = int_to_ptr.vmem [resolvable:$true] %s157
          %160 = dma.hbm_to_vmem [thread:$0]  %s155, 512, %s158, %s146
        $region28: #{patch_classifier_forward.1} parent=23 // pred_fallthru
          _
      $region24: #{patch_classifier_forward.1} parent=5 // pred_fallthru
        _
      %p161 = scmp.le.s32.totalorder 1, %s13
      %p162 = scmp.lt.s32.totalorder %s13, 3
      %p163 = pnand %p161, %p162
      %p164 = pneg %p163
      // Predicated region
      $region29: #{patch_classifier_forward.1} parent=5 // pred_check
        _
      $region30: #{patch_classifier_forward.1} parent=5 // pred_check_branch
        %166 = sbr.rel (%p163) target = $region32
      $region31: #{patch_classifier_forward.1} parent=5 // pred_region
        %s167 = ssub.s32 %s13, 1
        %s168 = sand.u32 %s26, 1
        %s169 = scalar_lea.sflag [#allocation3], %s168
        %s170 = sand.u32 %s26, 1
        %s171 = smul.addr %s170, 32
        %s172 = scalar_lea.vmem [#allocation2], %s171
        // Predicated region
        $region33: #{patch_classifier_forward.1} parent=31 // pred_check
          %p173 = pneg %p39
        $region34: #{patch_classifier_forward.1} parent=31 // pred_check_branch
          %175 = sbr.rel (%p173) target = $region36
        $region35: #{patch_classifier_forward.1} parent=31 // pred_region
          %176 = dma.done %s169, 512
        $region36: #{patch_classifier_forward.1} parent=31 // pred_fallthru
          _
        // Predicated region
        $region37: #{patch_classifier_forward.1} parent=31 // pred_check
          %p177 = pneg %p60
        $region38: #{patch_classifier_forward.1} parent=31 // pred_check_branch
          %179 = sbr.rel (%p177) target = $region40
        $region39: #{patch_classifier_forward.1} parent=31 // pred_region
          %180 = dma.done [#allocation5], 8192
        $region40: #{patch_classifier_forward.1} parent=31 // pred_fallthru
          _
        %s181 = sand.u32 %s26, 1
        %s182 = scalar_lea.sflag [#allocation3], %s181
        %s183 = sand.u32 %s26, 1
        %s184 = smul.addr %s183, 32
        %s185 = scalar_lea.vmem [#allocation2], %s184
        %p186 = pneg %p39
        %p187 = pneg %p36
        %p188 = pneg %p60
        %p189 = pneg %p57
        %p190 = pneg %p81
        %p191 = pneg %p78
        %p192 = pneg %p107
        %p193 = pneg %p104
        %p194 = scmp.lt.s32.totalorder %s18, 1
        %s195 = scalar_select %p194, %s18, 1
        %s196 = smul.addr %s195, 8
        %s197 = scalar_lea.vmem %s3, %s196
        %p198 = scmp.lt.s32.totalorder %s18, 1
        %s199 = scalar_select %p198, %s18, 1
        %s200 = smul.addr %s199, 8
        %s201 = scalar_lea.vmem %s3, %s200
        %v202 = vld [vmem:[%s172] sm:$0xff]
        %v203 = vld [vmem:[%s172 + $0x8] sm:$0xff]
        %v204 = vld [vmem:[%s172 + $0x10] sm:$0xff]
        %v205 = vld [vmem:[%s172 + $0x18] sm:$0xff]
        %v206 = vld [vmem:[#allocation4] sm:$0xff]
        %v207 = vld [vmem:[#allocation4 + $0x8] sm:$0xff]
        %v208 = vld [vmem:[#allocation4 + $0x10] sm:$0xff]
        %v209 = vld [vmem:[#allocation4 + $0x18] sm:$0xff]
        %v210 = vld [vmem:[#allocation4 + $0x20] sm:$0xff]
        %v211 = vld [vmem:[#allocation4 + $0x28] sm:$0xff]
        %v212 = vld [vmem:[#allocation4 + $0x30] sm:$0xff]
        %v213 = vld [vmem:[#allocation4 + $0x38] sm:$0xff]
        %v214 = vld [vmem:[#allocation4 + $0x40] sm:$0xff]
        %v215 = vld [vmem:[#allocation4 + $0x48] sm:$0xff]
        %v216 = vld [vmem:[#allocation4 + $0x50] sm:$0xff]
        %v217 = vld [vmem:[#allocation4 + $0x58] sm:$0xff]
        %v218 = vld [vmem:[#allocation4 + $0x60] sm:$0xff]
        %v219 = vld [vmem:[#allocation4 + $0x68] sm:$0xff]
        %v220 = vld [vmem:[#allocation4 + $0x70] sm:$0xff]
        %v221 = vld [vmem:[#allocation4 + $0x78] sm:$0xff]
        %v222 = vld [vmem:[#allocation4 + $0x80] sm:$0xff]
        %v223 = vld [vmem:[#allocation4 + $0x88] sm:$0xff]
        %v224 = vld [vmem:[#allocation4 + $0x90] sm:$0xff]
        %v225 = vld [vmem:[#allocation4 + $0x98] sm:$0xff]
        %v226 = vld [vmem:[#allocation4 + $0xa0] sm:$0xff]
        %v227 = vld [vmem:[#allocation4 + $0xa8] sm:$0xff]
        %v228 = vld [vmem:[#allocation4 + $0xb0] sm:$0xff]
        %v229 = vld [vmem:[#allocation4 + $0xb8] sm:$0xff]
        %v230 = vld [vmem:[#allocation4 + $0xc0] sm:$0xff]
        %v231 = vld [vmem:[#allocation4 + $0xc8] sm:$0xff]
        %v232 = vld [vmem:[#allocation4 + $0xd0] sm:$0xff]
        %v233 = vld [vmem:[#allocation4 + $0xd8] sm:$0xff]
        %v234 = vld [vmem:[#allocation4 + $0xe0] sm:$0xff]
        %v235 = vld [vmem:[#allocation4 + $0xe8] sm:$0xff]
        %v236 = vld [vmem:[#allocation4 + $0xf0] sm:$0xff]
        %v237 = vld [vmem:[#allocation4 + $0xf8] sm:$0xff]
        %v238 = vld [vmem:[#allocation4 + $0x100] sm:$0xff]
        %v239 = vld [vmem:[#allocation4 + $0x108] sm:$0xff]
        %v240 = vld [vmem:[#allocation4 + $0x110] sm:$0xff]
        %v241 = vld [vmem:[#allocation4 + $0x118] sm:$0xff]
        %v242 = vld [vmem:[#allocation4 + $0x120] sm:$0xff]
        %v243 = vld [vmem:[#allocation4 + $0x128] sm:$0xff]
        %v244 = vld [vmem:[#allocation4 + $0x130] sm:$0xff]
        %v245 = vld [vmem:[#allocation4 + $0x138] sm:$0xff]
        %v246 = vld [vmem:[#allocation4 + $0x140] sm:$0xff]
        %v247 = vld [vmem:[#allocation4 + $0x148] sm:$0xff]
        %v248 = vld [vmem:[#allocation4 + $0x150] sm:$0xff]
        %v249 = vld [vmem:[#allocation4 + $0x158] sm:$0xff]
        %v250 = vld [vmem:[#allocation4 + $0x160] sm:$0xff]
        %v251 = vld [vmem:[#allocation4 + $0x168] sm:$0xff]
        %v252 = vld [vmem:[#allocation4 + $0x170] sm:$0xff]
        %v253 = vld [vmem:[#allocation4 + $0x178] sm:$0xff]
        %v254 = vld [vmem:[#allocation4 + $0x180] sm:$0xff]
        %v255 = vld [vmem:[#allocation4 + $0x188] sm:$0xff]
        %v256 = vld [vmem:[#allocation4 + $0x190] sm:$0xff]
        %v257 = vld [vmem:[#allocation4 + $0x198] sm:$0xff]
        %v258 = vld [vmem:[#allocation4 + $0x1a0] sm:$0xff]
        %v259 = vld [vmem:[#allocation4 + $0x1a8] sm:$0xff]
        %v260 = vld [vmem:[#allocation4 + $0x1b0] sm:$0xff]
        %v261 = vld [vmem:[#allocation4 + $0x1b8] sm:$0xff]
        %v262 = vld [vmem:[#allocation4 + $0x1c0] sm:$0xff]
        %v263 = vld [vmem:[#allocation4 + $0x1c8] sm:$0xff]
        %v264 = vld [vmem:[#allocation4 + $0x1d0] sm:$0xff]
        %v265 = vld [vmem:[#allocation4 + $0x1d8] sm:$0xff]
        %v266 = vld [vmem:[#allocation4 + $0x1e0] sm:$0xff]
        %v267 = vld [vmem:[#allocation4 + $0x1e8] sm:$0xff]
        %v268 = vld [vmem:[#allocation4 + $0x1f0] sm:$0xff]
        %v269 = vld [vmem:[#allocation4 + $0x1f8] sm:$0xff]
        %v270 = vld [vmem:[%s2] sm:$0x1]
        %v272 = vlaneseq
        %v273 = vshrl.u32 %v272, 7
        %v274 = vsub.s32 0, %v273
        %v275 = vrot.slane %v270, %v274
        %277 = vmatprep.subr.mxu0 0.0
        %278 = vmatpush1.msra.mxu0 %v206
        %279 = vmatprep.subr.mxu0 0.0
        %280 = vmatpush1.msra.mxu0 %v207
        %281 = vmatprep.subr.mxu0 0.0
        %282 = vmatpush1.msra.mxu0 %v208
        %283 = vmatprep.subr.mxu0 0.0
        %284 = vmatpush1.msra.mxu0 %v209
        %285 = vmatprep.subr.mxu0 0.0
        %286 = vmatpush1.msra.mxu0 %v210
        %287 = vmatprep.subr.mxu0 0.0
        %288 = vmatpush1.msra.mxu0 %v211
        %289 = vmatprep.subr.mxu0 0.0
        %290 = vmatpush1.msra.mxu0 %v212
        %291 = vmatprep.subr.mxu0 0.0
        %292 = vmatpush1.msra.mxu0 %v213
        %293 = vmatprep.subr.mxu0 0.0
        %294 = vmatpush1.msra.mxu0 %v214
        %295 = vmatprep.subr.mxu0 0.0
        %296 = vmatpush1.msra.mxu0 %v215
        %297 = vmatprep.subr.mxu0 0.0
        %298 = vmatpush1.msra.mxu0 %v216
        %299 = vmatprep.subr.mxu0 0.0
        %300 = vmatpush1.msra.mxu0 %v217
        %301 = vmatprep.subr.mxu0 0.0
        %302 = vmatpush1.msra.mxu0 %v218
        %303 = vmatprep.subr.mxu0 0.0
        %304 = vmatpush1.msra.mxu0 %v219
        %305 = vmatprep.subr.mxu0 0.0
        %306 = vmatpush1.msra.mxu0 %v220
        %307 = vmatprep.subr.mxu0 0.0
        %308 = vmatpush1.msra.mxu0 %v221
        %309 = vmatprep.subr.mxu0 0.0
        %310 = vmatpush1.msra.mxu0 %v222
        %311 = vmatprep.subr.mxu0 0.0
        %312 = vmatpush1.msra.mxu0 %v223
        %313 = vmatprep.subr.mxu0 0.0
        %314 = vmatpush1.msra.mxu0 %v224
        %315 = vmatprep.subr.mxu0 0.0
        %316 = vmatpush1.msra.mxu0 %v225
        %317 = vmatprep.subr.mxu0 0.0
        %318 = vmatpush1.msra.mxu0 %v226
        %319 = vmatprep.subr.mxu0 0.0
        %320 = vmatpush1.msra.mxu0 %v227
        %321 = vmatprep.subr.mxu0 0.0
        %322 = vmatpush1.msra.mxu0 %v228
        %323 = vmatprep.subr.mxu0 0.0
        %324 = vmatpush1.msra.mxu0 %v229
        %325 = vmatprep.subr.mxu0 0.0
        %326 = vmatpush1.msra.mxu0 %v230
        %327 = vmatprep.subr.mxu0 0.0
        %328 = vmatpush1.msra.mxu0 %v231
        %329 = vmatprep.subr.mxu0 0.0
        %330 = vmatpush1.msra.mxu0 %v232
        %331 = vmatprep.subr.mxu0 0.0
        %332 = vmatpush1.msra.mxu0 %v233
        %333 = vmatprep.subr.mxu0 0.0
        %334 = vmatpush1.msra.mxu0 %v234
        %335 = vmatprep.subr.mxu0 0.0
        %336 = vmatpush1.msra.mxu0 %v235
        %337 = vmatprep.subr.mxu0 0.0
        %338 = vmatpush1.msra.mxu0 %v236
        %339 = vmatprep.subr.mxu0 0.0
        %340 = vmatpush1.msra.mxu0 %v237
        %341 = vmatprep.mubr.f32.mxu0 %v203
        %342 = vmatmul.mubr.f32.gmra.mrb[0].mxu0 %v202
        %v343 = vpop.f32.mrb[0].mxu0
        %v344 = vadd.f32 %v275, %v343
        %v345 = vpop.f32.mrb[0].mxu0
        %346 = vdwg.mxu0
        %347 = vmatprep.subr.mxu0 0.0
        %348 = vmatpush1.msra.mxu0 %v238
        %349 = vmatprep.subr.mxu0 0.0
        %350 = vmatpush1.msra.mxu0 %v239
        %351 = vmatprep.subr.mxu0 0.0
        %352 = vmatpush1.msra.mxu0 %v240
        %353 = vmatprep.subr.mxu0 0.0
        %354 = vmatpush1.msra.mxu0 %v241
        %355 = vmatprep.subr.mxu0 0.0
        %356 = vmatpush1.msra.mxu0 %v242
        %357 = vmatprep.subr.mxu0 0.0
        %358 = vmatpush1.msra.mxu0 %v243
        %359 = vmatprep.subr.mxu0 0.0
        %360 = vmatpush1.msra.mxu0 %v244
        %361 = vmatprep.subr.mxu0 0.0
        %362 = vmatpush1.msra.mxu0 %v245
        %363 = vmatprep.subr.mxu0 0.0
        %364 = vmatpush1.msra.mxu0 %v246
        %365 = vmatprep.subr.mxu0 0.0
        %366 = vmatpush1.msra.mxu0 %v247
        %367 = vmatprep.subr.mxu0 0.0
        %368 = vmatpush1.msra.mxu0 %v248
        %369 = vmatprep.subr.mxu0 0.0
        %370 = vmatpush1.msra.mxu0 %v249
        %371 = vmatprep.subr.mxu0 0.0
        %372 = vmatpush1.msra.mxu0 %v250
        %373 = vmatprep.subr.mxu0 0.0
        %374 = vmatpush1.msra.mxu0 %v251
        %375 = vmatprep.subr.mxu0 0.0
        %376 = vmatpush1.msra.mxu0 %v252
        %377 = vmatprep.subr.mxu0 0.0
        %378 = vmatpush1.msra.mxu0 %v253
        %379 = vmatprep.subr.mxu0 0.0
        %380 = vmatpush1.msra.mxu0 %v254
        %381 = vmatprep.subr.mxu0 0.0
        %382 = vmatpush1.msra.mxu0 %v255
        %383 = vmatprep.subr.mxu0 0.0
        %384 = vmatpush1.msra.mxu0 %v256
        %385 = vmatprep.subr.mxu0 0.0
        %386 = vmatpush1.msra.mxu0 %v257
        %387 = vmatprep.subr.mxu0 0.0
        %388 = vmatpush1.msra.mxu0 %v258
        %389 = vmatprep.subr.mxu0 0.0
        %390 = vmatpush1.msra.mxu0 %v259
        %391 = vmatprep.subr.mxu0 0.0
        %392 = vmatpush1.msra.mxu0 %v260
        %393 = vmatprep.subr.mxu0 0.0
        %394 = vmatpush1.msra.mxu0 %v261
        %395 = vmatprep.subr.mxu0 0.0
        %396 = vmatpush1.msra.mxu0 %v262
        %397 = vmatprep.subr.mxu0 0.0
        %398 = vmatpush1.msra.mxu0 %v263
        %399 = vmatprep.subr.mxu0 0.0
        %400 = vmatpush1.msra.mxu0 %v264
        %401 = vmatprep.subr.mxu0 0.0
        %402 = vmatpush1.msra.mxu0 %v265
        %403 = vmatprep.subr.mxu0 0.0
        %404 = vmatpush1.msra.mxu0 %v266
        %405 = vmatprep.subr.mxu0 0.0
        %406 = vmatpush1.msra.mxu0 %v267
        %407 = vmatprep.subr.mxu0 0.0
        %408 = vmatpush1.msra.mxu0 %v268
        %409 = vmatprep.subr.mxu0 0.0
        %410 = vmatpush1.msra.mxu0 %v269
        %411 = vmatprep.mubr.f32.mxu0 %v205
        %412 = vmatmul.mubr.f32.gmra.mrb[0].mxu0 %v204
        %v413 = vpop.f32.mrb[0].mxu0
        %v414 = vadd.f32 %v344, %v413
        %v415 = vpop.f32.mrb[0].mxu0
        %416 = vdwg.mxu0
        %417 = vst [vmem:[%s201] sm:$0xff] %v414
        %p418 = scmp.lt.s32.totalorder %s18, 1
        %s419 = scalar_select %p418, %s18, 1
        %s420 = smul.addr %s419, 8
        %s421 = scalar_lea.vmem %s3, %s420
        // Predicated region
        $region41: #{patch_classifier_forward.1} parent=31 // pred_check
          %p422 = pneg %p104
        $region42: #{patch_classifier_forward.1} parent=31 // pred_check_branch
          %424 = sbr.rel (%p422) target = $region44
        $region43: #{patch_classifier_forward.1} parent=31 // pred_region
          _
        $region44: #{patch_classifier_forward.1} parent=31 // pred_fallthru
          _
      $region32: #{patch_classifier_forward.1} parent=5 // pred_fallthru
        _
      %p425 = scmp.le.s32.totalorder 2, %s13
      // Predicated region
      $region45: #{patch_classifier_forward.1} parent=5 // pred_check
        %p426 = pneg %p425
      $region46: #{patch_classifier_forward.1} parent=5 // pred_check_branch
        %428 = sbr.rel (%p426) target = $region48
      $region47: #{patch_classifier_forward.1} parent=5 // pred_region
        %s429 = ssub.s32 %s13, 2
        // Predicated region
        $region49: #{patch_classifier_forward.1} parent=47 // pred_check
          %p430 = pneg %p110
        $region50: #{patch_classifier_forward.1} parent=47 // pred_check_branch
          %432 = sbr.rel (%p430) target = $region52
        $region51: #{patch_classifier_forward.1} parent=47 // pred_region
          %p433 = scmp.lt.s32.totalorder %s19, 1
          %s434 = scalar_select %p433, %s19, 1
          %s435 = smul.addr %s434, 8
          %s436 = scalar_lea.vmem %s3, %s435
        $region52: #{patch_classifier_forward.1} parent=47 // pred_fallthru
          _
      $region48: #{patch_classifier_forward.1} parent=5 // pred_fallthru
        _
    $region6: #{patch_classifier_forward.1} parent=1 // loop_footer
      %s17 = sadd.s32 1, %s13
    $region7: #{patch_classifier_forward.1} parent=1 // loop_footer_branch
      %12 = sbr.rel target = $region3
    $region8: #{patch_classifier_forward.1} parent=1 // loop_exit
      _
    %437 = vsyncpa [#allocation3], 1
    %s438 = scalar_lea.sflag [#allocation3], 1
    %439 = vsyncpa %s438, 1
    %440 = vsyncpa [#allocation5], 1

</llo_original>
